<compile_context>
chip_gen: v7x
topology: tpu7x:2x2x1
jax: 0.10.0
libtpu: 0.0.40
codegen_flags: <defaults>
</compile_context>

<pallas_src>
import jax
import jax.numpy as jnp
from jax import lax
from jax.experimental import pallas as pl
from jax.experimental.pallas import tpu as pltpu


_MIN_PALLAS_M = 1024            # below this the whole working set is a few KB


def _round8(x):
    return ((x + 7) // 8) * 8


def _vmem_limit_bytes():
    """Generation-aware scoped-VMEM budget (~96 MiB v5e/v6e, ~48 MiB v7x)."""
    try:
        cap = int(pltpu.get_tpu_info().vmem_capacity_bytes)
    except Exception:
        cap = 64 * 1024 * 1024          # conservative fallback (v7x per-TC size)
    return int(min(cap * 3 // 4, 100 * 1024 * 1024))


def _choose_lane_chunk(m):
    """Lane-axis chunk for the in-kernel loops (keeps temporaries small)."""
    if m <= 2048:
        return m
    for mc in (2048, 1024, 512, 256, 128):
        if m % mc == 0:
            return mc
    return m


def _choose_block_batch(b, per_batch_tile_bytes, mc, vmem_limit):
    """Batches per grid step.

    Budget: double-buffered input tiles + chunked f32 temporaries must fit the
    scoped VMEM limit; keep >= 2 grid steps (v7x dual-TC sharding + pipeline
    overlap); pick a divisor of b so no wrapper-side padding copy is needed.
    """
    inter_bytes = 72 * mc * 4                 # chunked per-batch f32 temporaries
    per_batch = 2 * per_batch_tile_bytes + inter_bytes
    headroom = 2 * 1024 * 1024                # output buffers, compiler slop
    budget = max(vmem_limit - headroom, per_batch)
    bt = max(1, budget // per_batch)
    if b >= 2:
        bt = min(bt, -(-b // 2))              # ceil(b/2) -> at least 2 grid steps
    bt = int(min(bt, b))
    while b % bt != 0:                        # largest divisor of b <= bt
        bt -= 1
    return bt


# ----------------------------------------------------------------------------
# Pallas kernel: Bt batches per step -> per-step lane-dense partial L1 sums
# ----------------------------------------------------------------------------
def _make_attn_recon_kernel(mc):
    def kernel(sm_ref, inp_ref, q_ref, gt_ref, out_ref):
        # sm_ref : (Bt, k, m)  extraction_softmax
        # inp_ref: (Bt, c, m)  resized input image, flattened spatial
        # q_ref  : (Bt, k, m)  semantic_distribution (pre-softmax logits)
        # gt_ref : (Bt, c, m)  resized ground-truth image, flattened spatial
        # out_ref: (1, m)      per-block partial sum of |estimated - gt|
        bt, k, m = sm_ref.shape
        c = inp_ref.shape[1]
        nchunks = m // mc
        unroll = nchunks <= 8

        # ---- Phase A: extracted[b, c, k] = sum_m inp[b,c,m] * sm[b,k,m] ----
        # VPU broadcast-multiply + chunked accumulate + lane reduce instead of
        # an (M=c, N=k, K=m) MXU matmul whose weight-push cadence saturates.
        def phase_a(j, acc):
            off = pl.multiple_of(j * mc, mc)
            inp_c = inp_ref[:, :, pl.ds(off, mc)].astype(jnp.float32)  # (Bt,c,mc)
            sm_c = sm_ref[:, :, pl.ds(off, mc)].astype(jnp.float32)    # (Bt,k,mc)
            prod = inp_c[:, :, None, :] * sm_c[:, None, :, :]          # (Bt,c,k,mc)
            return acc + jnp.sum(prod, axis=-1)                        # (Bt,c,k)

        extracted = lax.fori_loop(
            0, nchunks, phase_a, jnp.zeros((bt, c, k), jnp.float32),
            unroll=unroll)

        # ---- Phase B: label softmax, mix (MXU), |est - gt|, lane partials ----
        def phase_b(j, carry):
            off = pl.multiple_of(j * mc, mc)
            q_c = q_ref[:, :, pl.ds(off, mc)].astype(jnp.float32)      # (Bt,k,mc)
            q_max = jnp.max(q_c, axis=1, keepdims=True)                # (Bt,1,mc)
            q_exp = jnp.exp(q_c - q_max)                               # (Bt,k,mc)
            q_den = jnp.sum(q_exp, axis=1, keepdims=True)              # (Bt,1,mc)
            # est_un[b,c,mc] = sum_k extracted[b,c,k] * q_exp[b,k,mc]
            # (K=k, N=mc: good MXU shape; softmax normalization folded in after)
            est_un = lax.dot_general(
                extracted, q_exp,
                dimension_numbers=(((2,), (1,)), ((0,), (0,))),
                preferred_element_type=jnp.float32)                    # (Bt,c,mc)
            gt_c = gt_ref[:, :, pl.ds(off, mc)].astype(jnp.float32)    # (Bt,c,mc)
            diff = jnp.abs(est_un * (1.0 / q_den) - gt_c)              # (Bt,c,mc)
            # reduce batch (leading) + channel (sublane); keep lanes dense
            partial = jnp.sum(diff, axis=0)                            # (c, mc)
            out_ref[:, pl.ds(off, mc)] = jnp.sum(partial, axis=0,
                                                 keepdims=True)        # (1, mc)
            return carry

        lax.fori_loop(0, nchunks, phase_b, 0, unroll=unroll)

    return kernel


def _attn_recon_abs_sum(softmax, inp, query, gt):
    """Returns sum_b sum_{c,m} |estimated_target - gt| for one scale."""
    b, k, m = softmax.shape
    c = inp.shape[1]
    mc = _choose_lane_chunk(m)
    vmem_limit = _vmem_limit_bytes()
    per_batch_tile_bytes = m * (
        _round8(k) * softmax.dtype.itemsize + _round8(c) * inp.dtype.itemsize +
        _round8(k) * query.dtype.itemsize + _round8(c) * gt.dtype.itemsize)
    bt = _choose_block_batch(b, per_batch_tile_bytes, mc, vmem_limit)
    nb = b // bt                                  # bt divides b -> no padding

    out = pl.pallas_call(
        _make_attn_recon_kernel(mc),
        out_shape=jax.ShapeDtypeStruct((nb, 1, m), jnp.float32),
        grid=(nb,),
        in_specs=[
            pl.BlockSpec((bt, k, m), lambda i: (i, 0, 0)),   # extraction_softmax
            pl.BlockSpec((bt, c, m), lambda i: (i, 0, 0)),   # resized input
            pl.BlockSpec((bt, k, m), lambda i: (i, 0, 0)),   # semantic logits
            pl.BlockSpec((bt, c, m), lambda i: (i, 0, 0)),   # resized gt
        ],
        out_specs=pl.BlockSpec((None, 1, m), lambda i: (i, 0, 0)),
        compiler_params=pltpu.CompilerParams(
            dimension_semantics=("parallel",),
            vmem_limit_bytes=vmem_limit),
    )(softmax, inp, query, gt)
    return jnp.sum(out)


# ----------------------------------------------------------------------------
# Glue: nearest-neighbor interpolation (F.interpolate default) + loss assembly
# ----------------------------------------------------------------------------
def _nearest_resize(x, h, w):
    """PyTorch F.interpolate(x, (h, w)) with default mode='nearest', NCHW."""
    B, C, H, W = x.shape
    ri = (jnp.arange(h) * H) // h
    ci = (jnp.arange(w) * W) // w
    return x[:, :, ri][:, :, :, ci]


def _expand_input_batch(input_image, b):
    """Matches cal_attn_image's expand: [x0,x0,...,x1,x1,...] grouping."""
    ib, ic, ih, iw = input_image.shape
    if ib == b:
        return input_image
    rep = b // ib
    x = jnp.broadcast_to(input_image[:, None], (ib, rep, ic, ih, iw))
    return x.reshape(b, ic, ih, iw)
    # NOTE: like the PyTorch module, gt is NOT expanded; gt batch must equal b.


def _single_scale_loss(softmax, query, input_image, gt_image):
    b, num_label, h, w = query.shape
    gt_ = _nearest_resize(gt_image, h, w)
    inp_ = _nearest_resize(input_image, h, w)
    inp_ = _expand_input_batch(inp_, b)

    m = h * w
    c = inp_.shape[1]
    # keep the producers' native dtypes; the kernel upcasts per lane-chunk
    inp_flat = inp_.reshape(b, c, m)
    gt_flat = gt_.reshape(b, c, m)
    q_flat = query.reshape(b, num_label, m)
    sm_flat = softmax.reshape(b, num_label, m)

    if m < _MIN_PALLAS_M:
        # tiny scales (h=8/16): XLA fusion beats pallas_call launch overhead
        extracted = jnp.einsum('bkm,bcm->bck',
                               sm_flat.astype(jnp.float32),
                               inp_flat.astype(jnp.float32))
        q_sm = jax.nn.softmax(q_flat.astype(jnp.float32), axis=1)
        est = jnp.einsum('bkm,bck->bcm', q_sm, extracted)
        return jnp.mean(jnp.abs(est - gt_flat.astype(jnp.float32)))

    abs_sum = _attn_recon_abs_sum(sm_flat, inp_flat, q_flat, gt_flat)
    return abs_sum / (b * c * m)   # nn.L1Loss() default reduction='mean'


DEFAULT_WEIGHTS = {8: 1, 16: 0.5, 32: 0.25, 64: 0.125, 128: 0.0625}


def attn_recon_loss(attn_dict, input_image, gt_image, weights=DEFAULT_WEIGHTS):
    softmax = attn_dict['extraction_softmax']
    query = attn_dict['semantic_distribution']
    if isinstance(softmax, (list, tuple)) or isinstance(query, (list, tuple)):
        loss, wsum = 0.0, 0.0
        for item_softmax, item_query in zip(softmax, query):
            h = item_query.shape[2]
            loss = loss + _single_scale_loss(
                item_softmax, item_query, input_image, gt_image) * weights[h]
            wsum += weights[h]
        return loss / wsum
    return _single_scale_loss(softmax, query, input_image, gt_image)


# ----------------------------------------------------------------------------
# Pure-JAX reference (for a silent sanity check)
# ----------------------------------------------------------------------------
def _ref_single_scale(softmax, query, input_image, gt_image):
    b, k, h, w = query.shape
    gt_ = _nearest_resize(gt_image, h, w).reshape(b, -1, h * w)
    inp_ = _nearest_resize(input_image, h, w).reshape(b, -1, h * w)
    extracted = jnp.einsum('bkm,bvm->bvk', softmax, inp_)
    q_sm = jax.nn.softmax(query.reshape(b, k, h * w), axis=1)
    est = jnp.einsum('bkm,bvk->bvm', q_sm, extracted)
    return jnp.mean(jnp.abs(est - gt_))


def _ref_loss(attn_dict, input_image, gt_image, weights=DEFAULT_WEIGHTS):
    sms, qs = attn_dict['extraction_softmax'], attn_dict['semantic_distribution']
    loss, wsum = 0.0, 0.0
    for sm, q in zip(sms, qs):
        h = q.shape[2]
        loss += _ref_single_scale(sm, q, input_image, gt_image) * weights[h]
        wsum += weights[h]
    return loss / wsum


# ----------------------------------------------------------------------------
if __name__ == "__main__":
    key = jax.random.PRNGKey(0)
    k0, k1, k2 = jax.random.split(key, 3)

    B, C, NUM_LABEL = 2, 3, 8
    H_IMG = W_IMG = 64
    # 8 -> tiny-scale XLA path; 32 (m=1024, 1 chunk) and 64 (m=4096, 2 chunks)
    # -> Pallas kernel with nb = 2 grid steps each.
    scales = [8, 32, 64]

    input_image = jax.random.normal(k0, (B, C, H_IMG, W_IMG), jnp.float32)
    gt_image = jax.random.normal(k1, (B, C, H_IMG, W_IMG), jnp.float32)

    softmax_list, query_list = [], []
    for i, s in enumerate(scales):
        ks, kq = jax.random.split(jax.random.fold_in(k2, i))
        # extraction_softmax: (b, num_label, h*w), softmax over spatial axis
        logits = jax.random.normal(ks, (B, NUM_LABEL, s * s), jnp.float32)
        softmax_list.append(jax.nn.softmax(logits, axis=-1))
        # semantic_distribution (query): raw logits, (b, num_label, h, w)
        query_list.append(jax.random.normal(kq, (B, NUM_LABEL, s, s),
                                            jnp.float32))

    attn_dict = {
        'extraction_softmax': softmax_list,
        'semantic_distribution': query_list,
    }

    loss = jax.block_until_ready(attn_recon_loss(attn_dict, input_image,
                                                 gt_image))
    ref = jax.block_until_ready(_ref_loss(attn_dict, input_image, gt_image))
    assert jnp.allclose(loss, ref, rtol=1e-5, atol=1e-5), (loss, ref)

    print("KERNEL_OK")
</pallas_src>

<mosaic_0001>
module attributes {stable_mosaic.version = 11 : i64} {
  func.func @kernel(%arg0: i32, %arg1: memref<1x8x1024xf32, #tpu.memory_space<vmem>>, %arg2: memref<1x3x1024xf32, #tpu.memory_space<vmem>>, %arg3: memref<1x8x1024xf32, #tpu.memory_space<vmem>>, %arg4: memref<1x3x1024xf32, #tpu.memory_space<vmem>>, %arg5: memref<1x1x1024xf32, #tpu.memory_space<vmem>>) attributes {dimension_semantics = [#tpu.dimension_semantics<parallel>], iteration_bounds = array<i64: 2>, scalar_prefetch = 0 : i64, scratch_operands = 0 : i64, tpu.core_type = #tpu.core_type<tc>, window_params = [{transform_indices = @transform_0, window_bounds = array<i64: 1, 8, 1024>}, {transform_indices = @transform_1, window_bounds = array<i64: 1, 3, 1024>}, {transform_indices = @transform_2, window_bounds = array<i64: 1, 8, 1024>}, {transform_indices = @transform_3, window_bounds = array<i64: 1, 3, 1024>}, {transform_indices = @transform_4, window_bounds = array<i64: 1, 1, 1024>}]} {
    %cst = arith.constant 0.000000e+00 : f32
    %0 = vector.broadcast %cst : f32 to vector<1x3x8xf32>
    %c0_i32 = arith.constant 0 : i32
    %c1024_i32 = arith.constant 1024 : i32
    %1 = arith.muli %c0_i32, %c1024_i32 : i32
    %2 = tpu.assume_multiple %1, 1024 : i32
    %c0 = arith.constant 0 : index
    %c0_0 = arith.constant 0 : index
    %3 = arith.index_cast %2 : i32 to index
    %4 = vector.load %arg2[%c0, %c0_0, %3] : memref<1x3x1024xf32, #tpu.memory_space<vmem>>, vector<1x3x1024xf32>
    %c0_1 = arith.constant 0 : index
    %c0_2 = arith.constant 0 : index
    %5 = arith.index_cast %2 : i32 to index
    %6 = vector.load %arg1[%c0_1, %c0_2, %5] : memref<1x8x1024xf32, #tpu.memory_space<vmem>>, vector<1x8x1024xf32>
    %7 = vector.shape_cast %4 : vector<1x3x1024xf32> to vector<1x3x1x1024xf32>
    %8 = vector.shape_cast %6 : vector<1x8x1024xf32> to vector<1x1x8x1024xf32>
    %9 = vector.broadcast %7 : vector<1x3x1x1024xf32> to vector<1x3x8x1024xf32>
    %10 = vector.broadcast %8 : vector<1x1x8x1024xf32> to vector<1x3x8x1024xf32>
    %11 = arith.mulf %9, %10 : vector<1x3x8x1024xf32>
    %cst_3 = arith.constant dense<0.000000e+00> : vector<1x3x8xf32>
    %12 = vector.multi_reduction <add>, %11, %cst_3 [3] : vector<1x3x8x1024xf32> to vector<1x3x8xf32>
    %13 = arith.addf %0, %12 : vector<1x3x8xf32>
    %c1_i32 = arith.constant 1 : i32
    %c0_i32_4 = arith.constant 0 : i32
    %c1024_i32_5 = arith.constant 1024 : i32
    %14 = arith.muli %c0_i32_4, %c1024_i32_5 : i32
    %15 = tpu.assume_multiple %14, 1024 : i32
    %c0_6 = arith.constant 0 : index
    %c0_7 = arith.constant 0 : index
    %16 = arith.index_cast %15 : i32 to index
    %17 = vector.load %arg3[%c0_6, %c0_7, %16] : memref<1x8x1024xf32, #tpu.memory_space<vmem>>, vector<1x8x1024xf32>
    %cst_8 = arith.constant dense<0xFF800000> : vector<1x1024xf32>
    %18 = vector.multi_reduction <maximumf>, %17, %cst_8 [1] : vector<1x8x1024xf32> to vector<1x1024xf32>
    %19 = vector.shape_cast %18 : vector<1x1024xf32> to vector<1x1x1024xf32>
    %20 = vector.broadcast %19 : vector<1x1x1024xf32> to vector<1x8x1024xf32>
    %21 = arith.subf %17, %20 : vector<1x8x1024xf32>
    %22 = math.exp %21 : vector<1x8x1024xf32>
    %cst_9 = arith.constant dense<0.000000e+00> : vector<1x1024xf32>
    %23 = vector.multi_reduction <add>, %22, %cst_9 [1] : vector<1x8x1024xf32> to vector<1x1024xf32>
    %24 = vector.shape_cast %23 : vector<1x1024xf32> to vector<1x1x1024xf32>
    %cst_10 = arith.constant dense<0.000000e+00> : vector<1x3x1024xf32>
    %25 = tpu.matmul %13, %22, %cst_10 {dimension_numbers = #tpu.dot_dimension_numbers<[2], [1], [1], [2], [0, 0, 0, 1, 1, 2], [0], [0]>} : vector<1x3x8xf32>, vector<1x8x1024xf32>, vector<1x3x1024xf32> -> vector<1x3x1024xf32>
    %c0_11 = arith.constant 0 : index
    %c0_12 = arith.constant 0 : index
    %26 = arith.index_cast %15 : i32 to index
    %27 = vector.load %arg4[%c0_11, %c0_12, %26] : memref<1x3x1024xf32, #tpu.memory_space<vmem>>, vector<1x3x1024xf32>
    %cst_13 = arith.constant 1.000000e+00 : f32
    %28 = vector.broadcast %cst_13 : f32 to vector<1x1x1024xf32>
    %29 = arith.divf %28, %24 : vector<1x1x1024xf32>
    %30 = vector.broadcast %29 : vector<1x1x1024xf32> to vector<1x3x1024xf32>
    %31 = arith.mulf %25, %30 : vector<1x3x1024xf32>
    %32 = arith.subf %31, %27 : vector<1x3x1024xf32>
    %33 = math.absf %32 : vector<1x3x1024xf32>
    %cst_14 = arith.constant dense<0.000000e+00> : vector<3x1024xf32>
    %34 = vector.multi_reduction <add>, %33, %cst_14 [0] : vector<1x3x1024xf32> to vector<3x1024xf32>
    %cst_15 = arith.constant dense<0.000000e+00> : vector<1024xf32>
    %35 = vector.multi_reduction <add>, %34, %cst_15 [0] : vector<3x1024xf32> to vector<1024xf32>
    %36 = vector.shape_cast %35 : vector<1024xf32> to vector<1x1024xf32>
    %c0_16 = arith.constant 0 : index
    %c0_17 = arith.constant 0 : index
    %37 = arith.index_cast %15 : i32 to index
    %38 = vector.load %arg5[%c0_16, %c0_17, %37] : memref<1x1x1024xf32, #tpu.memory_space<vmem>>, vector<1x1x1024xf32>
    %39 = vector.shape_cast %38 : vector<1x1x1024xf32> to vector<1x1024xf32>
    %40 = vector.shape_cast %36 : vector<1x1024xf32> to vector<1x1x1024xf32>
    tpu.vector_store %arg5[%c0_16, %c0_17, %37], %40 {strides = array<i32>} : memref<1x1x1024xf32, #tpu.memory_space<vmem>>, vector<1x1x1024xf32>,
    %c1_i32_18 = arith.constant 1 : i32
    return
  }
  func.func @transform_0(%arg0: i32) -> (i32, i32, i32) {
    %c0_i32 = arith.constant 0 : i32
    %c0_i32_0 = arith.constant 0 : i32
    %c0_i32_1 = arith.constant 0 : i32
    return %arg0, %c0_i32, %c0_i32_0 : i32, i32, i32
  }
  func.func @transform_1(%arg0: i32) -> (i32, i32, i32) {
    %c0_i32 = arith.constant 0 : i32
    %c0_i32_0 = arith.constant 0 : i32
    %c0_i32_1 = arith.constant 0 : i32
    return %arg0, %c0_i32, %c0_i32_0 : i32, i32, i32
  }
  func.func @transform_2(%arg0: i32) -> (i32, i32, i32) {
    %c0_i32 = arith.constant 0 : i32
    %c0_i32_0 = arith.constant 0 : i32
    %c0_i32_1 = arith.constant 0 : i32
    return %arg0, %c0_i32, %c0_i32_0 : i32, i32, i32
  }
  func.func @transform_3(%arg0: i32) -> (i32, i32, i32) {
    %c0_i32 = arith.constant 0 : i32
    %c0_i32_0 = arith.constant 0 : i32
    %c0_i32_1 = arith.constant 0 : i32
    return %arg0, %c0_i32, %c0_i32_0 : i32, i32, i32
  }
  func.func @transform_4(%arg0: i32) -> (i32, i32, i32) {
    %c0_i32 = arith.constant 0 : i32
    %c0_i32_0 = arith.constant 0 : i32
    %c0_i32_1 = arith.constant 0 : i32
    return %arg0, %c0_i32, %c0_i32_0 : i32, i32, i32
  }
}

</mosaic_0001>

<llo_original>
// kernel: tpu_custom_call.1
$region0: #{tpu_custom_call.1}
  #allocation0 [shape = 'u32[]', space=smem, size = 0x4, offset = 0x4, fixed_abs, tag = 'smem constant byte address 0x4 - core index']
  #allocation1 [shape = 'u32[144,128]{1,0:T(1,128)}', space=vmem, size = 0x12000, scoped, tag = 'internal scratch']
  %s0 = inlined_call_operand.vmem [shape: f32[2,8,1024], index: 0, kind: input, shape index: {}]
  %s1 = inlined_call_operand.vmem [shape: f32[2,3,1024], index: 1, kind: input, shape index: {}]
  %s2 = inlined_call_operand.hbm [shape: f32[2,8,1024], index: 2, kind: input, shape index: {}]
  %s3 = inlined_call_operand.vmem [shape: f32[2,3,1024], index: 3, kind: input, shape index: {}]
  %s4 = inlined_call_operand.hbm [shape: f32[2,1,1024], index: 4, kind: output, shape index: {}]
  %s5 = sld [smem:[#allocation0]]
  $region53: #{tpu_custom_call.1} parent=0
    _
  %s7 = ssub.s32 1, %s5
  %s8 = scalar_select 0, %s7, %s5
  $region1: #{tpu_custom_call.1} parent=0
    #allocation2 [shape = 'u8[65536]{0}', space=vmem, size = 0x10000, scoped, tag = 'input window, operand 2']
    #allocation3 [shape = 's32[2]{0}', space=sflag, size = 0x8, scoped, tag = 'scoped memory for tpu_custom_call.1']
    #allocation4 [shape = 's32[2]{0}', space=sflag, size = 0x8, scoped, tag = 'scoped memory for tpu_custom_call.1']
    #allocation5 [shape = 'u8[8192]{0}', space=vmem, size = 0x2000, scoped, tag = 'output window, operand 0']
    %9 = vsyncpa [#allocation3], 0
    %s10 = scalar_lea.sflag [#allocation3], 1
    %11 = vsyncpa %s10, 0
    %12 = vsyncpa [#allocation4], 0
    %s13 = scalar_lea.sflag [#allocation4], 1
    %14 = vsyncpa %s13, 0
    loop: start=0, step=1, limit=4
    $region2: #{tpu_custom_call.1} parent=1 // loop_pre_header
      _
    $region3: #{tpu_custom_call.1} parent=1 // loop_header
      %s16 = sphi 0, %s20
      %p17 = scmp.ge.s32.totalorder %s16, 4
      %s26 = sphi 0, %s28
      %s29 = sphi 0, %s26
      %s30 = sphi 0, %s29
      %s46 = sphi 0, %s30
      %s52 = sphi 0, %s54
      %s55 = sphi 0, %s52
      %s56 = sphi 0, %s55
      %s72 = sphi 0, %s56
      %s78 = sphi 0, %s80
      %s81 = sphi 0, %s78
      %s82 = sphi 0, %s81
      %s98 = sphi 0, %s82
      %s104 = sphi 0, %s106
      %s107 = sphi 0, %s104
      %s108 = sphi 0, %s107
      %s124 = sphi 0, %s108
      %s130 = sphi 0, %s132
      %s133 = sphi 0, %s130
      %s134 = sphi 0, %s133
      %s150 = sphi 0, %s134
    $region4: #{tpu_custom_call.1} parent=1 // loop_header_branch
      %19 = sbr.rel (%p17) target = $region8
    $region5: #{tpu_custom_call.1} parent=1 // loop_body
      %s21 = ssub.s32 %s16, 1
      %s22 = ssub.s32 %s16, 2
      %s23 = sadd.s32 %s16, 1
      %s24 = ssub.s32 %s16, %s23
      %p25 = scmp.eq.s32.totalorder %s24, 0
      %s27 = sadd.s32 %s26, 1
      %s28 = scalar_select %p25, %s26, %s27
      %p31 = pneg %p25
      %p32 = scmp.eq.s32.totalorder %s16, 1
      %p33 = por %p31, %p32
      %p34 = scmp.ne.s32.totalorder %s26, %s29
      %p35 = scmp.eq.s32.totalorder %s16, 0
      %p36 = por %p34, %p35
      %p37 = scmp.ne.s32.totalorder %s26, %s29
      %p38 = scmp.eq.s32.totalorder %s21, 1
      %p39 = por %p37, %p38
      %p40 = scmp.ne.s32.totalorder %s29, %s30
      %p41 = scmp.eq.s32.totalorder %s21, 0
      %p42 = por %p40, %p41
      %p43 = scmp.ne.s32.totalorder %s29, %s30
      %p44 = scmp.eq.s32.totalorder %s22, 1
      %p45 = por %p43, %p44
      %p47 = scmp.ne.s32.totalorder %s30, %s46
      %p48 = scmp.eq.s32.totalorder %s22, 0
      %p49 = por %p47, %p48
      %s50 = ssub.s32 %s16, %s23
      %p51 = scmp.eq.s32.totalorder %s50, 0
      %s53 = sadd.s32 %s52, 1
      %s54 = scalar_select %p51, %s52, %s53
      %p57 = pneg %p51
      %p58 = scmp.eq.s32.totalorder %s16, 1
      %p59 = por %p57, %p58
      %p60 = scmp.ne.s32.totalorder %s52, %s55
      %p61 = scmp.eq.s32.totalorder %s16, 0
      %p62 = por %p60, %p61
      %p63 = scmp.ne.s32.totalorder %s52, %s55
      %p64 = scmp.eq.s32.totalorder %s21, 1
      %p65 = por %p63, %p64
      %p66 = scmp.ne.s32.totalorder %s55, %s56
      %p67 = scmp.eq.s32.totalorder %s21, 0
      %p68 = por %p66, %p67
      %p69 = scmp.ne.s32.totalorder %s55, %s56
      %p70 = scmp.eq.s32.totalorder %s22, 1
      %p71 = por %p69, %p70
      %p73 = scmp.ne.s32.totalorder %s56, %s72
      %p74 = scmp.eq.s32.totalorder %s22, 0
      %p75 = por %p73, %p74
      %s76 = ssub.s32 %s16, %s23
      %p77 = scmp.eq.s32.totalorder %s76, 0
      %s79 = sadd.s32 %s78, 1
      %s80 = scalar_select %p77, %s78, %s79
      %p83 = pneg %p77
      %p84 = scmp.eq.s32.totalorder %s16, 1
      %p85 = por %p83, %p84
      %p86 = scmp.ne.s32.totalorder %s78, %s81
      %p87 = scmp.eq.s32.totalorder %s16, 0
      %p88 = por %p86, %p87
      %p89 = scmp.ne.s32.totalorder %s78, %s81
      %p90 = scmp.eq.s32.totalorder %s21, 1
      %p91 = por %p89, %p90
      %p92 = scmp.ne.s32.totalorder %s81, %s82
      %p93 = scmp.eq.s32.totalorder %s21, 0
      %p94 = por %p92, %p93
      %p95 = scmp.ne.s32.totalorder %s81, %s82
      %p96 = scmp.eq.s32.totalorder %s22, 1
      %p97 = por %p95, %p96
      %p99 = scmp.ne.s32.totalorder %s82, %s98
      %p100 = scmp.eq.s32.totalorder %s22, 0
      %p101 = por %p99, %p100
      %s102 = ssub.s32 %s16, %s23
      %p103 = scmp.eq.s32.totalorder %s102, 0
      %s105 = sadd.s32 %s104, 1
      %s106 = scalar_select %p103, %s104, %s105
      %p109 = pneg %p103
      %p110 = scmp.eq.s32.totalorder %s16, 1
      %p111 = por %p109, %p110
      %p112 = scmp.ne.s32.totalorder %s104, %s107
      %p113 = scmp.eq.s32.totalorder %s16, 0
      %p114 = por %p112, %p113
      %p115 = scmp.ne.s32.totalorder %s104, %s107
      %p116 = scmp.eq.s32.totalorder %s21, 1
      %p117 = por %p115, %p116
      %p118 = scmp.ne.s32.totalorder %s107, %s108
      %p119 = scmp.eq.s32.totalorder %s21, 0
      %p120 = por %p118, %p119
      %p121 = scmp.ne.s32.totalorder %s107, %s108
      %p122 = scmp.eq.s32.totalorder %s22, 1
      %p123 = por %p121, %p122
      %p125 = scmp.ne.s32.totalorder %s108, %s124
      %p126 = scmp.eq.s32.totalorder %s22, 0
      %p127 = por %p125, %p126
      %s128 = ssub.s32 %s16, %s23
      %p129 = scmp.eq.s32.totalorder %s128, 0
      %s131 = sadd.s32 %s130, 1
      %s132 = scalar_select %p129, %s130, %s131
      %p135 = pneg %p129
      %p136 = scmp.eq.s32.totalorder %s16, 1
      %p137 = por %p135, %p136
      %p138 = scmp.ne.s32.totalorder %s130, %s133
      %p139 = scmp.eq.s32.totalorder %s16, 0
      %p140 = por %p138, %p139
      %p141 = scmp.ne.s32.totalorder %s130, %s133
      %p142 = scmp.eq.s32.totalorder %s21, 1
      %p143 = por %p141, %p142
      %p144 = scmp.ne.s32.totalorder %s133, %s134
      %p145 = scmp.eq.s32.totalorder %s21, 0
      %p146 = por %p144, %p145
      %p147 = scmp.ne.s32.totalorder %s133, %s134
      %p148 = scmp.eq.s32.totalorder %s22, 1
      %p149 = por %p147, %p148
      %p151 = scmp.ne.s32.totalorder %s134, %s150
      %p152 = scmp.eq.s32.totalorder %s22, 0
      %p153 = por %p151, %p152
      %p154 = scmp.le.s32.totalorder 1, %s16
      %p155 = scmp.lt.s32.totalorder %s16, 3
      %p156 = pnand %p154, %p155
      %p157 = pneg %p156
      // Predicated region
      $region9: #{tpu_custom_call.1} parent=5 // pred_check
        _
      $region10: #{tpu_custom_call.1} parent=5 // pred_check_branch
        %159 = sbr.rel (%p156) target = $region12
      $region11: #{tpu_custom_call.1} parent=5 // pred_region
        %s160 = ssub.s32 %s16, 1
      $region12: #{tpu_custom_call.1} parent=5 // pred_fallthru
        _
      %p161 = scmp.lt.s32.totalorder %s16, 2
      // Predicated region
      $region13: #{tpu_custom_call.1} parent=5 // pred_check
        %p162 = pneg %p161
      $region14: #{tpu_custom_call.1} parent=5 // pred_check_branch
        %164 = sbr.rel (%p162) target = $region16
      $region15: #{tpu_custom_call.1} parent=5 // pred_region
        // Predicated region
        $region17: #{tpu_custom_call.1} parent=15 // pred_check
          %p165 = pneg %p36
        $region18: #{tpu_custom_call.1} parent=15 // pred_check_branch
          %167 = sbr.rel (%p165) target = $region20
        $region19: #{tpu_custom_call.1} parent=15 // pred_region
          %p168 = scmp.lt.s32.totalorder %s16, 1
          %s169 = scalar_select %p168, %s16, 1
          %s170 = smul.addr %s169, 8
          %s171 = smul.addr %s170, 8
          %s172 = scalar_lea.vmem %s0, %s171
        $region20: #{tpu_custom_call.1} parent=15 // pred_fallthru
          _
        // Predicated region
        $region21: #{tpu_custom_call.1} parent=15 // pred_check
          %p173 = pneg %p62
        $region22: #{tpu_custom_call.1} parent=15 // pred_check_branch
          %175 = sbr.rel (%p173) target = $region24
        $region23: #{tpu_custom_call.1} parent=15 // pred_region
          %p176 = scmp.lt.s32.totalorder %s16, 1
          %s177 = scalar_select %p176, %s16, 1
          %s178 = smul.addr %s177, 8
          %s179 = smul.addr %s178, 4
          %s180 = scalar_lea.vmem %s1, %s179
        $region24: #{tpu_custom_call.1} parent=15 // pred_fallthru
          _
        // Predicated region
        $region25: #{tpu_custom_call.1} parent=15 // pred_check
          %p181 = pneg %p88
        $region26: #{tpu_custom_call.1} parent=15 // pred_check_branch
          %183 = sbr.rel (%p181) target = $region28
        $region27: #{tpu_custom_call.1} parent=15 // pred_region
          %s184 = sand.u32 %s78, 1
          %s185 = scalar_lea.sflag [#allocation3], %s184
          %s186 = sand.u32 %s78, 1
          %s187 = smul.addr %s186, 64
          %s188 = scalar_lea.vmem [#allocation2], %s187
          %s190 = ssub.s32 1024, 1024
          %191 = vsyncadd %s185, %s190
          %s192 = smul.addr %s16, 8
          %s193 = smul.addr %s192, 128
          %s194 = scalar_lea.hbm %s2, %s193
          %s196 = sshll.u32 %s188, 4
          %s197 = int_to_ptr.vmem [resolvable:$true] %s196
          %199 = dma.hbm_to_vmem [thread:$0]  %s194, 1024, %s197, %s185
        $region28: #{tpu_custom_call.1} parent=15 // pred_fallthru
          _
        // Predicated region
        $region29: #{tpu_custom_call.1} parent=15 // pred_check
          %p200 = pneg %p114
        $region30: #{tpu_custom_call.1} parent=15 // pred_check_branch
          %202 = sbr.rel (%p200) target = $region32
        $region31: #{tpu_custom_call.1} parent=15 // pred_region
          %p203 = scmp.lt.s32.totalorder %s16, 1
          %s204 = scalar_select %p203, %s16, 1
          %s205 = smul.addr %s204, 8
          %s206 = smul.addr %s205, 4
          %s207 = scalar_lea.vmem %s3, %s206
        $region32: #{tpu_custom_call.1} parent=15 // pred_fallthru
          _
      $region16: #{tpu_custom_call.1} parent=5 // pred_fallthru
        _
      %p208 = scmp.le.s32.totalorder 1, %s16
      %p209 = scmp.lt.s32.totalorder %s16, 3
      %p210 = pnand %p208, %p209
      %p211 = pneg %p210
      // Predicated region
      $region33: #{tpu_custom_call.1} parent=5 // pred_check
        _
      $region34: #{tpu_custom_call.1} parent=5 // pred_check_branch
        %213 = sbr.rel (%p210) target = $region36
      $region35: #{tpu_custom_call.1} parent=5 // pred_region
        %s214 = ssub.s32 %s16, 1
        %s215 = sand.u32 %s81, 1
        %s216 = scalar_lea.sflag [#allocation3], %s215
        %s217 = sand.u32 %s81, 1
        %s218 = smul.addr %s217, 64
        %s219 = scalar_lea.vmem [#allocation2], %s218
        // Predicated region
        $region37: #{tpu_custom_call.1} parent=35 // pred_check
          %p220 = pneg %p94
        $region38: #{tpu_custom_call.1} parent=35 // pred_check_branch
          %222 = sbr.rel (%p220) target = $region40
        $region39: #{tpu_custom_call.1} parent=35 // pred_region
          %223 = dma.done %s216, 1024
        $region40: #{tpu_custom_call.1} parent=35 // pred_fallthru
          _
        %p224 = scmp.lt.s32.totalorder %s21, 1
        %s225 = scalar_select %p224, %s21, 1
        %s226 = smul.addr %s225, 8
        %s227 = smul.addr %s226, 8
        %s228 = scalar_lea.vmem %s0, %s227
        %p229 = pneg %p42
        %p230 = pneg %p39
        %p231 = scmp.lt.s32.totalorder %s21, 1
        %s232 = scalar_select %p231, %s21, 1
        %s233 = smul.addr %s232, 8
        %s234 = smul.addr %s233, 4
        %s235 = scalar_lea.vmem %s1, %s234
        %p236 = pneg %p68
        %p237 = pneg %p65
        %s238 = sand.u32 %s81, 1
        %s239 = scalar_lea.sflag [#allocation3], %s238
        %s240 = sand.u32 %s81, 1
        %s241 = smul.addr %s240, 64
        %s242 = scalar_lea.vmem [#allocation2], %s241
        %p243 = pneg %p94
        %p244 = pneg %p91
        %p245 = scmp.lt.s32.totalorder %s21, 1
        %s246 = scalar_select %p245, %s21, 1
        %s247 = smul.addr %s246, 8
        %s248 = smul.addr %s247, 4
        %s249 = scalar_lea.vmem %s3, %s248
        %p250 = pneg %p120
        %p251 = pneg %p117
        %p252 = pneg %p146
        %p253 = pneg %p143
        %s254 = sand.u32 %s133, 1
        %s255 = scalar_lea.sflag [#allocation4], %s254
        %s256 = sand.u32 %s133, 1
        %s257 = smul.addr %s256, 8
        %s258 = scalar_lea.vmem [#allocation5], %s257
        %p259 = scmp.lt.s32.totalorder %s21, 1
        %s260 = scalar_select %p259, %s21, 1
        %s261 = smul.addr %s260, 8
        %s262 = smul.addr %s261, 8
        %s263 = scalar_lea.vmem %s0, %s262
        %p264 = scmp.lt.s32.totalorder %s21, 1
        %s265 = scalar_select %p264, %s21, 1
        %s266 = smul.addr %s265, 8
        %s267 = smul.addr %s266, 4
        %s268 = scalar_lea.vmem %s1, %s267
        %p269 = scmp.lt.s32.totalorder %s21, 1
        %s270 = scalar_select %p269, %s21, 1
        %s271 = smul.addr %s270, 8
        %s272 = smul.addr %s271, 4
        %s273 = scalar_lea.vmem %s3, %s272
        %v274 = vld [vmem:[%s268] sm:$0x77]
        %v275 = vld [vmem:[%s268 + $0x8] sm:$0x77]
        %v276 = vld [vmem:[%s268 + $0x10] sm:$0x77]
        %v277 = vld [vmem:[%s268 + $0x18] sm:$0x77]
        %v278 = vld [vmem:[%s263] sm:$0xff]
        %v279 = vld [vmem:[%s263 + $0x8] sm:$0xff]
        %v280 = vld [vmem:[%s263 + $0x10] sm:$0xff]
        %v281 = vld [vmem:[%s263 + $0x18] sm:$0xff]
        %v282 = vld [vmem:[%s263 + $0x20] sm:$0xff]
        %v283 = vld [vmem:[%s263 + $0x28] sm:$0xff]
        %v284 = vld [vmem:[%s263 + $0x30] sm:$0xff]
        %v285 = vld [vmem:[%s263 + $0x38] sm:$0xff]
        %v291 = vunpack.c.l.s4 1966171168
        %v292 = vunpack.c.0.s8 %v291
        %v293 = vlaneseq
        %v294 = vshrl.u32 %v293, 7
        %v295 = vsub.s32 %v292, %v294
        %v296 = vrot.slane %v274, %v295
        %v298 = vunpack.c.l.s4 1966171168
        %v299 = vunpack.c.0.s8 %v298
        %v300 = vlaneseq
        %v301 = vshrl.u32 %v300, 7
        %v302 = vsub.s32 %v299, %v301
        %v303 = vrot.slane %v275, %v302
        %v305 = vunpack.c.l.s4 1966171168
        %v306 = vunpack.c.0.s8 %v305
        %v307 = vlaneseq
        %v308 = vshrl.u32 %v307, 7
        %v309 = vsub.s32 %v306, %v308
        %v310 = vrot.slane %v276, %v309
        %v312 = vunpack.c.l.s4 1966171168
        %v313 = vunpack.c.0.s8 %v312
        %v314 = vlaneseq
        %v315 = vshrl.u32 %v314, 7
        %v316 = vsub.s32 %v313, %v315
        %v317 = vrot.slane %v277, %v316
        %v318 = vcombine.low %v296, %v303
        %v319 = vcombine.high %v296, %v303
        %v320 = vcombine.low %v310, %v317
        %v321 = vcombine.high %v310, %v317
        %v323 = vunpack.c.l.s4 1966171168
        %v324 = vunpack.c.0.s8 %v323
        %v325 = vlaneseq
        %v326 = vshrl.u32 %v325, 7
        %v327 = vsub.s32 %v324, %v326
        %v328 = vrot.slane %v318, %v327
        %v330 = vunpack.c.l.s4 1966171168
        %v331 = vunpack.c.0.s8 %v330
        %v332 = vlaneseq
        %v333 = vshrl.u32 %v332, 7
        %v334 = vsub.s32 %v331, %v333
        %v335 = vrot.slane %v319, %v334
        %v337 = vunpack.c.l.s4 1966171168
        %v338 = vunpack.c.0.s8 %v337
        %v339 = vlaneseq
        %v340 = vshrl.u32 %v339, 7
        %v341 = vsub.s32 %v338, %v340
        %v342 = vrot.slane %v320, %v341
        %v344 = vunpack.c.l.s4 1966171168
        %v345 = vunpack.c.0.s8 %v344
        %v346 = vlaneseq
        %v347 = vshrl.u32 %v346, 7
        %v348 = vsub.s32 %v345, %v347
        %v349 = vrot.slane %v321, %v348
        %v350 = vcombine.low %v328, %v342
        %v351 = vcombine.high %v328, %v342
        %v352 = vcombine.low %v335, %v349
        %v353 = vlaneseq
        %v354 = vshrl.u32 %v353, 7
        %v355 = vsub.s32 0, %v354
        %v356 = vrot.slane %v350, %v355
        %v357 = vlaneseq
        %v358 = vshrl.u32 %v357, 7
        %v359 = vsub.s32 1, %v358
        %v360 = vrot.slane %v350, %v359
        %v361 = vlaneseq
        %v362 = vshrl.u32 %v361, 7
        %v363 = vsub.s32 2, %v362
        %v364 = vrot.slane %v350, %v363
        %v365 = vlaneseq
        %v366 = vshrl.u32 %v365, 7
        %v367 = vsub.s32 3, %v366
        %v368 = vrot.slane %v350, %v367
        %v369 = vlaneseq
        %v370 = vshrl.u32 %v369, 7
        %v371 = vsub.s32 4, %v370
        %v372 = vrot.slane %v350, %v371
        %v373 = vlaneseq
        %v374 = vshrl.u32 %v373, 7
        %v375 = vsub.s32 5, %v374
        %v376 = vrot.slane %v350, %v375
        %v377 = vlaneseq
        %v378 = vshrl.u32 %v377, 7
        %v379 = vsub.s32 6, %v378
        %v380 = vrot.slane %v350, %v379
        %v381 = vlaneseq
        %v382 = vshrl.u32 %v381, 7
        %v383 = vsub.s32 7, %v382
        %v384 = vrot.slane %v350, %v383
        %v385 = vlaneseq
        %v386 = vshrl.u32 %v385, 7
        %v387 = vsub.s32 0, %v386
        %v388 = vrot.slane %v352, %v387
        %v389 = vlaneseq
        %v390 = vshrl.u32 %v389, 7
        %v391 = vsub.s32 1, %v390
        %v392 = vrot.slane %v352, %v391
        %v393 = vlaneseq
        %v394 = vshrl.u32 %v393, 7
        %v395 = vsub.s32 2, %v394
        %v396 = vrot.slane %v352, %v395
        %v397 = vlaneseq
        %v398 = vshrl.u32 %v397, 7
        %v399 = vsub.s32 3, %v398
        %v400 = vrot.slane %v352, %v399
        %v401 = vlaneseq
        %v402 = vshrl.u32 %v401, 7
        %v403 = vsub.s32 4, %v402
        %v404 = vrot.slane %v352, %v403
        %v405 = vlaneseq
        %v406 = vshrl.u32 %v405, 7
        %v407 = vsub.s32 5, %v406
        %v408 = vrot.slane %v352, %v407
        %v409 = vlaneseq
        %v410 = vshrl.u32 %v409, 7
        %v411 = vsub.s32 6, %v410
        %v412 = vrot.slane %v352, %v411
        %v413 = vlaneseq
        %v414 = vshrl.u32 %v413, 7
        %v415 = vsub.s32 7, %v414
        %v416 = vrot.slane %v352, %v415
        %v417 = vlaneseq
        %v418 = vshrl.u32 %v417, 7
        %v419 = vsub.s32 0, %v418
        %v420 = vrot.slane %v351, %v419
        %v421 = vlaneseq
        %v422 = vshrl.u32 %v421, 7
        %v423 = vsub.s32 1, %v422
        %v424 = vrot.slane %v351, %v423
        %v425 = vlaneseq
        %v426 = vshrl.u32 %v425, 7
        %v427 = vsub.s32 2, %v426
        %v428 = vrot.slane %v351, %v427
        %v429 = vlaneseq
        %v430 = vshrl.u32 %v429, 7
        %v431 = vsub.s32 3, %v430
        %v432 = vrot.slane %v351, %v431
        %v433 = vlaneseq
        %v434 = vshrl.u32 %v433, 7
        %v435 = vsub.s32 4, %v434
        %v436 = vrot.slane %v351, %v435
        %v437 = vlaneseq
        %v438 = vshrl.u32 %v437, 7
        %v439 = vsub.s32 5, %v438
        %v440 = vrot.slane %v351, %v439
        %v441 = vlaneseq
        %v442 = vshrl.u32 %v441, 7
        %v443 = vsub.s32 6, %v442
        %v444 = vrot.slane %v351, %v443
        %v445 = vlaneseq
        %v446 = vshrl.u32 %v445, 7
        %v447 = vsub.s32 7, %v446
        %v448 = vrot.slane %v351, %v447
        %v473 = vmul.f32 %v356, %v278
        %v474 = vmul.f32 %v360, %v279
        %v475 = vmul.f32 %v364, %v280
        %v476 = vmul.f32 %v368, %v281
        %v477 = vmul.f32 %v372, %v282
        %v478 = vmul.f32 %v376, %v283
        %v479 = vmul.f32 %v380, %v284
        %v480 = vmul.f32 %v384, %v285
        %v481 = vmul.f32 %v388, %v278
        %v482 = vmul.f32 %v392, %v279
        %v483 = vmul.f32 %v396, %v280
        %v484 = vmul.f32 %v400, %v281
        %v485 = vmul.f32 %v404, %v282
        %v486 = vmul.f32 %v408, %v283
        %v487 = vmul.f32 %v412, %v284
        %v488 = vmul.f32 %v416, %v285
        %v489 = vmul.f32 %v420, %v278
        %v490 = vmul.f32 %v424, %v279
        %v491 = vmul.f32 %v428, %v280
        %v492 = vmul.f32 %v432, %v281
        %v493 = vmul.f32 %v436, %v282
        %v494 = vmul.f32 %v440, %v283
        %v495 = vmul.f32 %v444, %v284
        %v496 = vmul.f32 %v448, %v285
        %v497 = vadd.f32 %v473, %v474
        %v498 = vadd.f32 %v497, %v475
        %v499 = vadd.f32 %v498, %v476
        %v500 = vadd.f32 %v499, %v477
        %v501 = vadd.f32 %v500, %v478
        %v502 = vadd.f32 %v501, %v479
        %v503 = vadd.f32 %v502, %v480
        %504 = vadd.xlane.f32.xlu0 %v503
        %v505 = vpop.xlane.xlu0 %504
        %v506 = vadd.f32 %v481, %v482
        %v507 = vadd.f32 %v506, %v483
        %v508 = vadd.f32 %v507, %v484
        %v509 = vadd.f32 %v508, %v485
        %v510 = vadd.f32 %v509, %v486
        %v511 = vadd.f32 %v510, %v487
        %v512 = vadd.f32 %v511, %v488
        %513 = vadd.xlane.f32.xlu0 %v512
        %v514 = vpop.xlane.xlu0 %513
        %v515 = vadd.f32 %v489, %v490
        %v516 = vadd.f32 %v515, %v491
        %v517 = vadd.f32 %v516, %v492
        %v518 = vadd.f32 %v517, %v493
        %v519 = vadd.f32 %v518, %v494
        %v520 = vadd.f32 %v519, %v495
        %v521 = vadd.f32 %v520, %v496
        %522 = vadd.xlane.f32.xlu0 %v521
        %v523 = vpop.xlane.xlu0 %522
        %v524 = vadd.f32 %v505, 0.0
        %v525 = vadd.f32 %v514, 0.0
        %v526 = vadd.f32 %v523, 0.0
        %v527 = vld [vmem:[%s219] sm:$0xff]
        %v528 = vld [vmem:[%s219 + $0x8] sm:$0xff]
        %v529 = vld [vmem:[%s219 + $0x10] sm:$0xff]
        %v530 = vld [vmem:[%s219 + $0x18] sm:$0xff]
        %v531 = vld [vmem:[%s219 + $0x20] sm:$0xff]
        %v532 = vld [vmem:[%s219 + $0x28] sm:$0xff]
        %v533 = vld [vmem:[%s219 + $0x30] sm:$0xff]
        %v534 = vld [vmem:[%s219 + $0x38] sm:$0xff]
        %v535 = vrot.slane %v527, 4
        %v536 = vmax.f32 %v527, %v535
        %v537 = vrot.slane %v536, 2
        %v538 = vmax.f32 %v536, %v537
        %v539 = vrot.slane %v538, 1
        %v540 = vmax.f32 %v538, %v539
        %v541 = vrot.slane %v528, 4
        %v542 = vmax.f32 %v528, %v541
        %v543 = vrot.slane %v542, 2
        %v544 = vmax.f32 %v542, %v543
        %v545 = vrot.slane %v544, 1
        %v546 = vmax.f32 %v544, %v545
        %v547 = vrot.slane %v529, 4
        %v548 = vmax.f32 %v529, %v547
        %v549 = vrot.slane %v548, 2
        %v550 = vmax.f32 %v548, %v549
        %v551 = vrot.slane %v550, 1
        %v552 = vmax.f32 %v550, %v551
        %v553 = vrot.slane %v530, 4
        %v554 = vmax.f32 %v530, %v553
        %v555 = vrot.slane %v554, 2
        %v556 = vmax.f32 %v554, %v555
        %v557 = vrot.slane %v556, 1
        %v558 = vmax.f32 %v556, %v557
        %v559 = vrot.slane %v531, 4
        %v560 = vmax.f32 %v531, %v559
        %v561 = vrot.slane %v560, 2
        %v562 = vmax.f32 %v560, %v561
        %v563 = vrot.slane %v562, 1
        %v564 = vmax.f32 %v562, %v563
        %v565 = vrot.slane %v532, 4
        %v566 = vmax.f32 %v532, %v565
        %v567 = vrot.slane %v566, 2
        %v568 = vmax.f32 %v566, %v567
        %v569 = vrot.slane %v568, 1
        %v570 = vmax.f32 %v568, %v569
        %v571 = vrot.slane %v533, 4
        %v572 = vmax.f32 %v533, %v571
        %v573 = vrot.slane %v572, 2
        %v574 = vmax.f32 %v572, %v573
        %v575 = vrot.slane %v574, 1
        %v576 = vmax.f32 %v574, %v575
        %v577 = vrot.slane %v534, 4
        %v578 = vmax.f32 %v534, %v577
        %v579 = vrot.slane %v578, 2
        %v580 = vmax.f32 %v578, %v579
        %v581 = vrot.slane %v580, 1
        %v582 = vmax.f32 %v580, %v581
        %v583 = vsub.f32 %v527, %v540
        %v584 = vsub.f32 %v528, %v546
        %v585 = vsub.f32 %v529, %v552
        %v586 = vsub.f32 %v530, %v558
        %v587 = vsub.f32 %v531, %v564
        %v588 = vsub.f32 %v532, %v570
        %v589 = vsub.f32 %v533, %v576
        %v590 = vsub.f32 %v534, %v582
        %v591 = vmul.f32 %v583, 1.442695
        %v592 = vpow.pop %v591
        %v593 = vmul.f32 %v584, 1.442695
        %v594 = vpow.pop %v593
        %v595 = vmul.f32 %v585, 1.442695
        %v596 = vpow.pop %v595
        %v597 = vmul.f32 %v586, 1.442695
        %v598 = vpow.pop %v597
        %v599 = vmul.f32 %v587, 1.442695
        %v600 = vpow.pop %v599
        %v601 = vmul.f32 %v588, 1.442695
        %v602 = vpow.pop %v601
        %v603 = vmul.f32 %v589, 1.442695
        %v604 = vpow.pop %v603
        %v605 = vmul.f32 %v590, 1.442695
        %v606 = vpow.pop %v605
        %v607 = vrot.slane %v592, 4
        %v608 = vadd.f32 %v592, %v607
        %v609 = vrot.slane %v608, 2
        %v610 = vadd.f32 %v608, %v609
        %v611 = vrot.slane %v610, 1
        %v612 = vadd.f32 %v610, %v611
        %v613 = vrot.slane %v594, 4
        %v614 = vadd.f32 %v594, %v613
        %v615 = vrot.slane %v614, 2
        %v616 = vadd.f32 %v614, %v615
        %v617 = vrot.slane %v616, 1
        %v618 = vadd.f32 %v616, %v617
        %v619 = vrot.slane %v596, 4
        %v620 = vadd.f32 %v596, %v619
        %v621 = vrot.slane %v620, 2
        %v622 = vadd.f32 %v620, %v621
        %v623 = vrot.slane %v622, 1
        %v624 = vadd.f32 %v622, %v623
        %v625 = vrot.slane %v598, 4
        %v626 = vadd.f32 %v598, %v625
        %v627 = vrot.slane %v626, 2
        %v628 = vadd.f32 %v626, %v627
        %v629 = vrot.slane %v628, 1
        %v630 = vadd.f32 %v628, %v629
        %v631 = vrot.slane %v600, 4
        %v632 = vadd.f32 %v600, %v631
        %v633 = vrot.slane %v632, 2
        %v634 = vadd.f32 %v632, %v633
        %v635 = vrot.slane %v634, 1
        %v636 = vadd.f32 %v634, %v635
        %v637 = vrot.slane %v602, 4
        %v638 = vadd.f32 %v602, %v637
        %v639 = vrot.slane %v638, 2
        %v640 = vadd.f32 %v638, %v639
        %v641 = vrot.slane %v640, 1
        %v642 = vadd.f32 %v640, %v641
        %v643 = vrot.slane %v604, 4
        %v644 = vadd.f32 %v604, %v643
        %v645 = vrot.slane %v644, 2
        %v646 = vadd.f32 %v644, %v645
        %v647 = vrot.slane %v646, 1
        %v648 = vadd.f32 %v646, %v647
        %v649 = vrot.slane %v606, 4
        %v650 = vadd.f32 %v606, %v649
        %v651 = vrot.slane %v650, 2
        %v652 = vadd.f32 %v650, %v651
        %v653 = vrot.slane %v652, 1
        %v654 = vadd.f32 %v652, %v653
        %v658 = vlaneseq
        %v659 = vand.u32 %v658, 127
        %v660 = vlaneseq
        %v661 = vshrl.u32 %v660, 7
        %v662 = vsub.s32 %v659, %v661
        %v663 = vrot.slane %v524, %v662
        %v664 = vlaneseq
        %v665 = vshrl.u32 %v664, 7
        %v666 = vsub.s32 %v659, %v665
        %v667 = vrot.slane %v525, %v666
        %v668 = vlaneseq
        %v669 = vshrl.u32 %v668, 7
        %v670 = vsub.s32 %v659, %v669
        %v671 = vrot.slane %v526, %v670
        %vm672 = vcmask 1041409
        %v673 = vsel %vm672, %v667, %v663
        %vm674 = vcmask 1042434
        %v675 = vsel %vm674, %v671, %v673
        %vm676 = vcmask 64512
        %v677 = vsel %vm676, %v675, 0
        %679 = vmatprep.subr.mxu0 %v594
        %680 = vmatpush1.msra.mxu0 %v592
        %681 = vmatprep.subr.mxu0 0.0
        %682 = vmatpush1.msra.mxu0 0.0
        %683 = vmatprep.subr.mxu0 0.0
        %684 = vmatpush1.msra.mxu0 0.0
        %685 = vmatprep.subr.mxu0 0.0
        %686 = vmatpush1.msra.mxu0 0.0
        %687 = vmatprep.subr.mxu0 0.0
        %688 = vmatpush1.msra.mxu0 0.0
        %689 = vmatprep.subr.mxu0 0.0
        %690 = vmatpush1.msra.mxu0 0.0
        %691 = vmatprep.subr.mxu0 0.0
        %692 = vmatpush1.msra.mxu0 0.0
        %693 = vmatprep.subr.mxu0 0.0
        %694 = vmatpush1.msra.mxu0 0.0
        %695 = vmatprep.subr.mxu0 0.0
        %696 = vmatpush1.msra.mxu0 0.0
        %697 = vmatprep.subr.mxu0 0.0
        %698 = vmatpush1.msra.mxu0 0.0
        %699 = vmatprep.subr.mxu0 0.0
        %700 = vmatpush1.msra.mxu0 0.0
        %701 = vmatprep.subr.mxu0 0.0
        %702 = vmatpush1.msra.mxu0 0.0
        %703 = vmatprep.subr.mxu0 0.0
        %704 = vmatpush1.msra.mxu0 0.0
        %705 = vmatprep.subr.mxu0 0.0
        %706 = vmatpush1.msra.mxu0 0.0
        %707 = vmatprep.subr.mxu0 0.0
        %708 = vmatpush1.msra.mxu0 0.0
        %709 = vmatprep.subr.mxu0 0.0
        %710 = vmatpush1.msra.mxu0 0.0
        %711 = vmatprep.subr.mxu0 0.0
        %712 = vmatpush1.msra.mxu0 0.0
        %713 = vmatprep.subr.mxu0 0.0
        %714 = vmatpush1.msra.mxu0 0.0
        %715 = vmatprep.subr.mxu0 0.0
        %716 = vmatpush1.msra.mxu0 0.0
        %717 = vmatprep.subr.mxu0 0.0
        %718 = vmatpush1.msra.mxu0 0.0
        %719 = vmatprep.subr.mxu0 0.0
        %720 = vmatpush1.msra.mxu0 0.0
        %721 = vmatprep.subr.mxu0 0.0
        %722 = vmatpush1.msra.mxu0 0.0
        %723 = vmatprep.subr.mxu0 0.0
        %724 = vmatpush1.msra.mxu0 0.0
        %725 = vmatprep.subr.mxu0 0.0
        %726 = vmatpush1.msra.mxu0 0.0
        %727 = vmatprep.subr.mxu0 0.0
        %728 = vmatpush1.msra.mxu0 0.0
        %729 = vmatprep.subr.mxu0 0.0
        %730 = vmatpush1.msra.mxu0 0.0
        %731 = vmatprep.subr.mxu0 0.0
        %732 = vmatpush1.msra.mxu0 0.0
        %733 = vmatprep.subr.mxu0 0.0
        %734 = vmatpush1.msra.mxu0 0.0
        %735 = vmatprep.subr.mxu0 0.0
        %736 = vmatpush1.msra.mxu0 0.0
        %737 = vmatprep.subr.mxu0 0.0
        %738 = vmatpush1.msra.mxu0 0.0
        %739 = vmatprep.subr.mxu0 0.0
        %740 = vmatpush1.msra.mxu0 0.0
        %741 = vmatprep.subr.mxu0 0.0
        %742 = vmatpush1.msra.mxu0 0.0
        %743 = vmatprep.mubr.f32.mxu0 0.0
        %744 = vmatmul.mubr.f32.gmra.mrb[0].mxu0 %v677
        %v745 = vpop.f32.mrb[0].mxu0
        %v746 = vadd.f32 0.0, %v745
        %v747 = vpop.f32.mrb[0].mxu0
        %v748 = vadd.f32 0.0, %v747
        %749 = vdwg.mxu0
        %750 = vmatprep.subr.mxu0 %v598
        %751 = vmatpush1.msra.mxu0 %v596
        %752 = vmatprep.subr.mxu0 0.0
        %753 = vmatpush1.msra.mxu0 0.0
        %754 = vmatprep.subr.mxu0 0.0
        %755 = vmatpush1.msra.mxu0 0.0
        %756 = vmatprep.subr.mxu0 0.0
        %757 = vmatpush1.msra.mxu0 0.0
        %758 = vmatprep.subr.mxu0 0.0
        %759 = vmatpush1.msra.mxu0 0.0
        %760 = vmatprep.subr.mxu0 0.0
        %761 = vmatpush1.msra.mxu0 0.0
        %762 = vmatprep.subr.mxu0 0.0
        %763 = vmatpush1.msra.mxu0 0.0
        %764 = vmatprep.subr.mxu0 0.0
        %765 = vmatpush1.msra.mxu0 0.0
        %766 = vmatprep.subr.mxu0 0.0
        %767 = vmatpush1.msra.mxu0 0.0
        %768 = vmatprep.subr.mxu0 0.0
        %769 = vmatpush1.msra.mxu0 0.0
        %770 = vmatprep.subr.mxu0 0.0
        %771 = vmatpush1.msra.mxu0 0.0
        %772 = vmatprep.subr.mxu0 0.0
        %773 = vmatpush1.msra.mxu0 0.0
        %774 = vmatprep.subr.mxu0 0.0
        %775 = vmatpush1.msra.mxu0 0.0
        %776 = vmatprep.subr.mxu0 0.0
        %777 = vmatpush1.msra.mxu0 0.0
        %778 = vmatprep.subr.mxu0 0.0
        %779 = vmatpush1.msra.mxu0 0.0
        %780 = vmatprep.subr.mxu0 0.0
        %781 = vmatpush1.msra.mxu0 0.0
        %782 = vmatprep.subr.mxu0 0.0
        %783 = vmatpush1.msra.mxu0 0.0
        %784 = vmatprep.subr.mxu0 0.0
        %785 = vmatpush1.msra.mxu0 0.0
        %786 = vmatprep.subr.mxu0 0.0
        %787 = vmatpush1.msra.mxu0 0.0
        %788 = vmatprep.subr.mxu0 0.0
        %789 = vmatpush1.msra.mxu0 0.0
        %790 = vmatprep.subr.mxu0 0.0
        %791 = vmatpush1.msra.mxu0 0.0
        %792 = vmatprep.subr.mxu0 0.0
        %793 = vmatpush1.msra.mxu0 0.0
        %794 = vmatprep.subr.mxu0 0.0
        %795 = vmatpush1.msra.mxu0 0.0
        %796 = vmatprep.subr.mxu0 0.0
        %797 = vmatpush1.msra.mxu0 0.0
        %798 = vmatprep.subr.mxu0 0.0
        %799 = vmatpush1.msra.mxu0 0.0
        %800 = vmatprep.subr.mxu0 0.0
        %801 = vmatpush1.msra.mxu0 0.0
        %802 = vmatprep.subr.mxu0 0.0
        %803 = vmatpush1.msra.mxu0 0.0
        %804 = vmatprep.subr.mxu0 0.0
        %805 = vmatpush1.msra.mxu0 0.0
        %806 = vmatprep.subr.mxu0 0.0
        %807 = vmatpush1.msra.mxu0 0.0
        %808 = vmatprep.subr.mxu0 0.0
        %809 = vmatpush1.msra.mxu0 0.0
        %810 = vmatprep.subr.mxu0 0.0
        %811 = vmatpush1.msra.mxu0 0.0
        %812 = vmatprep.subr.mxu0 0.0
        %813 = vmatpush1.msra.mxu0 0.0
        %814 = vmatprep.mubr.f32.mxu0 0.0
        %815 = vmatmul.mubr.f32.gmra.mrb[0].mxu0 %v677
        %v816 = vpop.f32.mrb[0].mxu0
        %v817 = vadd.f32 0.0, %v816
        %v818 = vpop.f32.mrb[0].mxu0
        %v819 = vadd.f32 0.0, %v818
        %820 = vdwg.mxu0
        %821 = vmatprep.subr.mxu0 %v602
        %822 = vmatpush1.msra.mxu0 %v600
        %823 = vmatprep.subr.mxu0 0.0
        %824 = vmatpush1.msra.mxu0 0.0
        %825 = vmatprep.subr.mxu0 0.0
        %826 = vmatpush1.msra.mxu0 0.0
        %827 = vmatprep.subr.mxu0 0.0
        %828 = vmatpush1.msra.mxu0 0.0
        %829 = vmatprep.subr.mxu0 0.0
        %830 = vmatpush1.msra.mxu0 0.0
        %831 = vmatprep.subr.mxu0 0.0
        %832 = vmatpush1.msra.mxu0 0.0
        %833 = vmatprep.subr.mxu0 0.0
        %834 = vmatpush1.msra.mxu0 0.0
        %835 = vmatprep.subr.mxu0 0.0
        %836 = vmatpush1.msra.mxu0 0.0
        %837 = vmatprep.subr.mxu0 0.0
        %838 = vmatpush1.msra.mxu0 0.0
        %839 = vmatprep.subr.mxu0 0.0
        %840 = vmatpush1.msra.mxu0 0.0
        %841 = vmatprep.subr.mxu0 0.0
        %842 = vmatpush1.msra.mxu0 0.0
        %843 = vmatprep.subr.mxu0 0.0
        %844 = vmatpush1.msra.mxu0 0.0
        %845 = vmatprep.subr.mxu0 0.0
        %846 = vmatpush1.msra.mxu0 0.0
        %847 = vmatprep.subr.mxu0 0.0
        %848 = vmatpush1.msra.mxu0 0.0
        %849 = vmatprep.subr.mxu0 0.0
        %850 = vmatpush1.msra.mxu0 0.0
        %851 = vmatprep.subr.mxu0 0.0
        %852 = vmatpush1.msra.mxu0 0.0
        %853 = vmatprep.subr.mxu0 0.0
        %854 = vmatpush1.msra.mxu0 0.0
        %855 = vmatprep.subr.mxu0 0.0
        %856 = vmatpush1.msra.mxu0 0.0
        %857 = vmatprep.subr.mxu0 0.0
        %858 = vmatpush1.msra.mxu0 0.0
        %859 = vmatprep.subr.mxu0 0.0
        %860 = vmatpush1.msra.mxu0 0.0
        %861 = vmatprep.subr.mxu0 0.0
        %862 = vmatpush1.msra.mxu0 0.0
        %863 = vmatprep.subr.mxu0 0.0
        %864 = vmatpush1.msra.mxu0 0.0
        %865 = vmatprep.subr.mxu0 0.0
        %866 = vmatpush1.msra.mxu0 0.0
        %867 = vmatprep.subr.mxu0 0.0
        %868 = vmatpush1.msra.mxu0 0.0
        %869 = vmatprep.subr.mxu0 0.0
        %870 = vmatpush1.msra.mxu0 0.0
        %871 = vmatprep.subr.mxu0 0.0
        %872 = vmatpush1.msra.mxu0 0.0
        %873 = vmatprep.subr.mxu0 0.0
        %874 = vmatpush1.msra.mxu0 0.0
        %875 = vmatprep.subr.mxu0 0.0
        %876 = vmatpush1.msra.mxu0 0.0
        %877 = vmatprep.subr.mxu0 0.0
        %878 = vmatpush1.msra.mxu0 0.0
        %879 = vmatprep.subr.mxu0 0.0
        %880 = vmatpush1.msra.mxu0 0.0
        %881 = vmatprep.subr.mxu0 0.0
        %882 = vmatpush1.msra.mxu0 0.0
        %883 = vmatprep.subr.mxu0 0.0
        %884 = vmatpush1.msra.mxu0 0.0
        %885 = vmatprep.mubr.f32.mxu0 0.0
        %886 = vmatmul.mubr.f32.gmra.mrb[0].mxu0 %v677
        %v887 = vpop.f32.mrb[0].mxu0
        %v888 = vadd.f32 0.0, %v887
        %v889 = vpop.f32.mrb[0].mxu0
        %v890 = vadd.f32 0.0, %v889
        %891 = vdwg.mxu0
        %892 = vmatprep.subr.mxu0 %v606
        %893 = vmatpush1.msra.mxu0 %v604
        %894 = vmatprep.subr.mxu0 0.0
        %895 = vmatpush1.msra.mxu0 0.0
        %896 = vmatprep.subr.mxu0 0.0
        %897 = vmatpush1.msra.mxu0 0.0
        %898 = vmatprep.subr.mxu0 0.0
        %899 = vmatpush1.msra.mxu0 0.0
        %900 = vmatprep.subr.mxu0 0.0
        %901 = vmatpush1.msra.mxu0 0.0
        %902 = vmatprep.subr.mxu0 0.0
        %903 = vmatpush1.msra.mxu0 0.0
        %904 = vmatprep.subr.mxu0 0.0
        %905 = vmatpush1.msra.mxu0 0.0
        %906 = vmatprep.subr.mxu0 0.0
        %907 = vmatpush1.msra.mxu0 0.0
        %908 = vmatprep.subr.mxu0 0.0
        %909 = vmatpush1.msra.mxu0 0.0
        %910 = vmatprep.subr.mxu0 0.0
        %911 = vmatpush1.msra.mxu0 0.0
        %912 = vmatprep.subr.mxu0 0.0
        %913 = vmatpush1.msra.mxu0 0.0
        %914 = vmatprep.subr.mxu0 0.0
        %915 = vmatpush1.msra.mxu0 0.0
        %916 = vmatprep.subr.mxu0 0.0
        %917 = vmatpush1.msra.mxu0 0.0
        %918 = vmatprep.subr.mxu0 0.0
        %919 = vmatpush1.msra.mxu0 0.0
        %920 = vmatprep.subr.mxu0 0.0
        %921 = vmatpush1.msra.mxu0 0.0
        %922 = vmatprep.subr.mxu0 0.0
        %923 = vmatpush1.msra.mxu0 0.0
        %924 = vmatprep.subr.mxu0 0.0
        %925 = vmatpush1.msra.mxu0 0.0
        %926 = vmatprep.subr.mxu0 0.0
        %927 = vmatpush1.msra.mxu0 0.0
        %928 = vmatprep.subr.mxu0 0.0
        %929 = vmatpush1.msra.mxu0 0.0
        %930 = vmatprep.subr.mxu0 0.0
        %931 = vmatpush1.msra.mxu0 0.0
        %932 = vmatprep.subr.mxu0 0.0
        %933 = vmatpush1.msra.mxu0 0.0
        %934 = vmatprep.subr.mxu0 0.0
        %935 = vmatpush1.msra.mxu0 0.0
        %936 = vmatprep.subr.mxu0 0.0
        %937 = vmatpush1.msra.mxu0 0.0
        %938 = vmatprep.subr.mxu0 0.0
        %939 = vmatpush1.msra.mxu0 0.0
        %940 = vmatprep.subr.mxu0 0.0
        %941 = vmatpush1.msra.mxu0 0.0
        %942 = vmatprep.subr.mxu0 0.0
        %943 = vmatpush1.msra.mxu0 0.0
        %944 = vmatprep.subr.mxu0 0.0
        %945 = vmatpush1.msra.mxu0 0.0
        %946 = vmatprep.subr.mxu0 0.0
        %947 = vmatpush1.msra.mxu0 0.0
        %948 = vmatprep.subr.mxu0 0.0
        %949 = vmatpush1.msra.mxu0 0.0
        %950 = vmatprep.subr.mxu0 0.0
        %951 = vmatpush1.msra.mxu0 0.0
        %952 = vmatprep.subr.mxu0 0.0
        %953 = vmatpush1.msra.mxu0 0.0
        %954 = vmatprep.subr.mxu0 0.0
        %955 = vmatpush1.msra.mxu0 0.0
        %956 = vmatprep.mubr.f32.mxu0 0.0
        %957 = vmatmul.mubr.f32.gmra.mrb[0].mxu0 %v677
        %v958 = vpop.f32.mrb[0].mxu0
        %v959 = vadd.f32 0.0, %v958
        %v960 = vpop.f32.mrb[0].mxu0
        %v961 = vadd.f32 0.0, %v960
        %962 = vdwg.mxu0
        %v963 = vld [vmem:[%s273] sm:$0x77]
        %v964 = vld [vmem:[%s273 + $0x8] sm:$0x77]
        %v965 = vld [vmem:[%s273 + $0x10] sm:$0x77]
        %v966 = vld [vmem:[%s273 + $0x18] sm:$0x77]
        %v967 = vrcp.pop %v612
        %v968 = vmul.f32 1.0, %v967
        %v969 = vrcp.pop %v618
        %v970 = vmul.f32 1.0, %v969
        %v971 = vrcp.pop %v624
        %v972 = vmul.f32 1.0, %v971
        %v973 = vrcp.pop %v630
        %v974 = vmul.f32 1.0, %v973
        %v975 = vrcp.pop %v636
        %v976 = vmul.f32 1.0, %v975
        %v977 = vrcp.pop %v642
        %v978 = vmul.f32 1.0, %v977
        %v979 = vrcp.pop %v648
        %v980 = vmul.f32 1.0, %v979
        %v981 = vrcp.pop %v654
        %v982 = vmul.f32 1.0, %v981
        %v983 = vmul.f32 %v746, %v968
        %v984 = vmul.f32 %v748, %v970
        %v985 = vmul.f32 %v817, %v972
        %v986 = vmul.f32 %v819, %v974
        %v987 = vmul.f32 %v888, %v976
        %v988 = vmul.f32 %v890, %v978
        %v989 = vmul.f32 %v959, %v980
        %v990 = vmul.f32 %v961, %v982
        %v995 = vcombine.high %v963, %v963
        %v996 = vcombine.high %v964, %v964
        %v997 = vcombine.high %v965, %v965
        %v998 = vcombine.high %v966, %v966
        %v1003 = vsub.f32 %v983, %v963
        %v1004 = vsub.f32 %v984, %v995
        %v1005 = vsub.f32 %v985, %v964
        %v1006 = vsub.f32 %v986, %v996
        %v1007 = vsub.f32 %v987, %v965
        %v1008 = vsub.f32 %v988, %v997
        %v1009 = vsub.f32 %v989, %v966
        %v1010 = vsub.f32 %v990, %v998
        %v1011 = vand.u32 2147483647, %v1003
        %v1012 = vand.u32 2147483647, %v1004
        %v1013 = vand.u32 2147483647, %v1005
        %v1014 = vand.u32 2147483647, %v1006
        %v1015 = vand.u32 2147483647, %v1007
        %v1016 = vand.u32 2147483647, %v1008
        %v1017 = vand.u32 2147483647, %v1009
        %v1018 = vand.u32 2147483647, %v1010
        %v1019 = vadd.f32 %v1011, 0.0
        %v1020 = vadd.f32 %v1012, 0.0
        %v1021 = vadd.f32 %v1013, 0.0
        %v1022 = vadd.f32 %v1014, 0.0
        %v1023 = vadd.f32 %v1015, 0.0
        %v1024 = vadd.f32 %v1016, 0.0
        %v1025 = vadd.f32 %v1017, 0.0
        %v1026 = vadd.f32 %v1018, 0.0
        %vm1027 = vcmask 1042432
        %v1028 = vsel %vm1027, %v1019, 0.0
        %v1029 = vrot.slane %v1028, 4
        %v1030 = vadd.f32 %v1028, %v1029
        %v1031 = vrot.slane %v1030, 2
        %v1032 = vadd.f32 %v1030, %v1031
        %v1033 = vrot.slane %v1032, 1
        %v1034 = vadd.f32 %v1032, %v1033
        %v1035 = vsel %vm1027, %v1020, 0.0
        %v1036 = vrot.slane %v1035, 4
        %v1037 = vadd.f32 %v1035, %v1036
        %v1038 = vrot.slane %v1037, 2
        %v1039 = vadd.f32 %v1037, %v1038
        %v1040 = vrot.slane %v1039, 1
        %v1041 = vadd.f32 %v1039, %v1040
        %v1042 = vsel %vm1027, %v1021, 0.0
        %v1043 = vrot.slane %v1042, 4
        %v1044 = vadd.f32 %v1042, %v1043
        %v1045 = vrot.slane %v1044, 2
        %v1046 = vadd.f32 %v1044, %v1045
        %v1047 = vrot.slane %v1046, 1
        %v1048 = vadd.f32 %v1046, %v1047
        %v1049 = vsel %vm1027, %v1022, 0.0
        %v1050 = vrot.slane %v1049, 4
        %v1051 = vadd.f32 %v1049, %v1050
        %v1052 = vrot.slane %v1051, 2
        %v1053 = vadd.f32 %v1051, %v1052
        %v1054 = vrot.slane %v1053, 1
        %v1055 = vadd.f32 %v1053, %v1054
        %v1056 = vsel %vm1027, %v1023, 0.0
        %v1057 = vrot.slane %v1056, 4
        %v1058 = vadd.f32 %v1056, %v1057
        %v1059 = vrot.slane %v1058, 2
        %v1060 = vadd.f32 %v1058, %v1059
        %v1061 = vrot.slane %v1060, 1
        %v1062 = vadd.f32 %v1060, %v1061
        %v1063 = vsel %vm1027, %v1024, 0.0
        %v1064 = vrot.slane %v1063, 4
        %v1065 = vadd.f32 %v1063, %v1064
        %v1066 = vrot.slane %v1065, 2
        %v1067 = vadd.f32 %v1065, %v1066
        %v1068 = vrot.slane %v1067, 1
        %v1069 = vadd.f32 %v1067, %v1068
        %v1070 = vsel %vm1027, %v1025, 0.0
        %v1071 = vrot.slane %v1070, 4
        %v1072 = vadd.f32 %v1070, %v1071
        %v1073 = vrot.slane %v1072, 2
        %v1074 = vadd.f32 %v1072, %v1073
        %v1075 = vrot.slane %v1074, 1
        %v1076 = vadd.f32 %v1074, %v1075
        %v1077 = vsel %vm1027, %v1026, 0.0
        %v1078 = vrot.slane %v1077, 4
        %v1079 = vadd.f32 %v1077, %v1078
        %v1080 = vrot.slane %v1079, 2
        %v1081 = vadd.f32 %v1079, %v1080
        %v1082 = vrot.slane %v1081, 1
        %v1083 = vadd.f32 %v1081, %v1082
        %v1092 = vcombine.low %v1034, %v1041
        %v1093 = vcombine.low %v1048, %v1055
        %v1094 = vcombine.low %v1062, %v1069
        %v1095 = vcombine.low %v1076, %v1083
        %v1097 = vunpack.c.l.s4 1966171168
        %v1098 = vunpack.c.0.s8 %v1097
        %v1099 = vlaneseq
        %v1100 = vshrl.u32 %v1099, 7
        %v1101 = vsub.s32 %v1098, %v1100
        %v1102 = vrot.slane %v1092, %v1101
        %v1104 = vunpack.c.l.s4 1966171168
        %v1105 = vunpack.c.0.s8 %v1104
        %v1106 = vlaneseq
        %v1107 = vshrl.u32 %v1106, 7
        %v1108 = vsub.s32 %v1105, %v1107
        %v1109 = vrot.slane %v1093, %v1108
        %v1111 = vunpack.c.l.s4 1966171168
        %v1112 = vunpack.c.0.s8 %v1111
        %v1113 = vlaneseq
        %v1114 = vshrl.u32 %v1113, 7
        %v1115 = vsub.s32 %v1112, %v1114
        %v1116 = vrot.slane %v1094, %v1115
        %v1118 = vunpack.c.l.s4 1966171168
        %v1119 = vunpack.c.0.s8 %v1118
        %v1120 = vlaneseq
        %v1121 = vshrl.u32 %v1120, 7
        %v1122 = vsub.s32 %v1119, %v1121
        %v1123 = vrot.slane %v1095, %v1122
        %v1124 = vcombine.low %v1102, %v1109
        %v1125 = vcombine.low %v1116, %v1123
        %v1127 = vunpack.c.l.s4 1966171168
        %v1128 = vunpack.c.0.s8 %v1127
        %v1129 = vlaneseq
        %v1130 = vshrl.u32 %v1129, 7
        %v1131 = vsub.s32 %v1128, %v1130
        %v1132 = vrot.slane %v1124, %v1131
        %v1134 = vunpack.c.l.s4 1966171168
        %v1135 = vunpack.c.0.s8 %v1134
        %v1136 = vlaneseq
        %v1137 = vshrl.u32 %v1136, 7
        %v1138 = vsub.s32 %v1135, %v1137
        %v1139 = vrot.slane %v1125, %v1138
        %v1140 = vcombine.low %v1132, %v1139
        %1142 = vst [vmem:[%s258] sm:$0xff] %v1140
        %s1143 = sand.u32 %s133, 1
        %s1144 = scalar_lea.sflag [#allocation4], %s1143
        %s1145 = sand.u32 %s133, 1
        %s1146 = smul.addr %s1145, 8
        %s1147 = scalar_lea.vmem [#allocation5], %s1146
        // Predicated region
        $region41: #{tpu_custom_call.1} parent=35 // pred_check
          %p1148 = pneg %p143
        $region42: #{tpu_custom_call.1} parent=35 // pred_check_branch
          %1150 = sbr.rel (%p1148) target = $region44
        $region43: #{tpu_custom_call.1} parent=35 // pred_region
          %s1152 = ssub.s32 128, 128
          %1153 = vsyncadd %s1144, %s1152
          %s1154 = smul.addr %s21, 8
          %s1155 = smul.addr %s1154, 16
          %s1156 = scalar_lea.hbm %s4, %s1155
          %s1158 = sshll.u32 %s1147, 4
          %s1159 = int_to_ptr.vmem [resolvable:$true] %s1158
          %1161 = dma.vmem_to_hbm [thread:$0]  %s1159, 128, %s1156, %s1144
        $region44: #{tpu_custom_call.1} parent=35 // pred_fallthru
          _
      $region36: #{tpu_custom_call.1} parent=5 // pred_fallthru
        _
      %p1162 = scmp.le.s32.totalorder 2, %s16
      // Predicated region
      $region45: #{tpu_custom_call.1} parent=5 // pred_check
        %p1163 = pneg %p1162
      $region46: #{tpu_custom_call.1} parent=5 // pred_check_branch
        %1165 = sbr.rel (%p1163) target = $region48
      $region47: #{tpu_custom_call.1} parent=5 // pred_region
        %s1166 = ssub.s32 %s16, 2
        // Predicated region
        $region49: #{tpu_custom_call.1} parent=47 // pred_check
          %p1167 = pneg %p149
        $region50: #{tpu_custom_call.1} parent=47 // pred_check_branch
          %1169 = sbr.rel (%p1167) target = $region52
        $region51: #{tpu_custom_call.1} parent=47 // pred_region
          %s1170 = sand.u32 %s134, 1
          %s1171 = scalar_lea.sflag [#allocation4], %s1170
          %s1172 = sand.u32 %s134, 1
          %s1173 = smul.addr %s1172, 8
          %s1174 = scalar_lea.vmem [#allocation5], %s1173
          %1175 = dma.done %s1171, 128
        $region52: #{tpu_custom_call.1} parent=47 // pred_fallthru
          _
      $region48: #{tpu_custom_call.1} parent=5 // pred_fallthru
        _
    $region6: #{tpu_custom_call.1} parent=1 // loop_footer
      %s20 = sadd.s32 1, %s16
    $region7: #{tpu_custom_call.1} parent=1 // loop_footer_branch
      %15 = sbr.rel target = $region3
    $region8: #{tpu_custom_call.1} parent=1 // loop_exit
      _
    %1176 = vsyncpa [#allocation3], 1
    %s1177 = scalar_lea.sflag [#allocation3], 1
    %1178 = vsyncpa %s1177, 1
    %1179 = vsyncpa [#allocation4], 1
    %s1180 = scalar_lea.sflag [#allocation4], 1
    %1181 = vsyncpa %s1180, 1

</llo_original>
